<compile_context>
chip_gen: v7x
topology: tpu7x:2x2x1
jax: 0.10.0
libtpu: 0.0.40
codegen_flags: <defaults>
</compile_context>

<pallas_src>
import numpy as np
import jax
import jax.numpy as jnp
from jax.experimental import pallas as pl
from jax.experimental.pallas import tpu as pltpu

IGNORE_INDEX = -100

_ROW_CHUNK = 256                   # rows of f32 temporaries live at once
_LOGITS_BLOCK_BYTES = 4 << 20      # target bytes per logits DMA block
_MAX_TILE_N = 2048
_VMEM_LIMIT = 32 * 1024 * 1024
_MXU_PRECISION = jax.lax.Precision.HIGHEST   # fp32 contraction on the MXU


def _round_up(n, m):
    return ((n + m - 1) // m) * m


def _round_down_to(n, m):
    return max(m, (n // m) * m)


def _pick_chunk(tile_n):
    """Largest sub-chunk (multiple of 8, <=_ROW_CHUNK) dividing tile_n."""
    if tile_n <= _ROW_CHUNK:
        return tile_n
    for c in (_ROW_CHUNK, 128, 64, 32, 16, 8):
        if tile_n % c == 0:
            return c
    return tile_n


def _choose_tile_n(N, C, itemsize):
    """Row tile sized to a byte budget, capped so the grid has >=2 tiles
    whenever the batch allows (keeps both v7x TensorCores busy)."""
    t = _LOGITS_BLOCK_BYTES // max(1, C * itemsize)
    t = max(_ROW_CHUNK, min(t, _MAX_TILE_N))
    n8 = _round_up(N, 8)
    half = max(8, ((n8 // 2) // 8) * 8)
    t = min(t, half)
    if t >= _ROW_CHUNK:
        return _round_down_to(t, _ROW_CHUNK)
    return _round_down_to(t, 8)


def _resolve_tile(N, C, itemsize, tile_n):
    if tile_n is None:
        tile_n = _choose_tile_n(N, C, itemsize)
    else:
        tile_n = max(8, (min(int(tile_n), _round_up(N, 8)) // 8) * 8)
    return tile_n, _pick_chunk(tile_n)


# ----------------------------------------------------------------------------
# Kernel bodies
# ----------------------------------------------------------------------------
def _per_chunk_losses(iif, ones_c, col, pred_ref, label_ref, start, chunk):
    """(chunk, 1) f32 per-sample CE of iif-scaled logits; 0 for ignored rows.

    iif:    (1, C) f32           (hoisted, loop-invariant)
    ones_c: (C, 128) f32 ones    (hoisted; MXU row-sum RHS)
    col:    (1, C) i32 iota      (hoisted)
    """
    x = pred_ref[pl.ds(start, chunk), :].astype(jnp.float32) * iif   # (chunk, C)
    lbl = label_ref[pl.ds(start, chunk), :]                          # (chunk, 1)

    m = jnp.max(x, axis=-1, keepdims=True)                           # XLU
    e = jnp.exp(x - m)                                               # EUP

    # Lane reductions on the (otherwise idle) MXU: row-sum == dot with ones.
    sum_e = jnp.dot(e, ones_c, precision=_MXU_PRECISION,
                    preferred_element_type=jnp.float32)[:, :1]       # (chunk, 1)

    xt = jnp.where(col == lbl, x, 0.0)                               # one-hot select
    tgt = jnp.dot(xt, ones_c, precision=_MXU_PRECISION,
                  preferred_element_type=jnp.float32)[:, :1]         # (chunk, 1)

    valid = (lbl != IGNORE_INDEX).astype(jnp.float32)
    return (m + jnp.log(sum_e) - tgt) * valid                        # (chunk, 1)


def _make_sum_kernel(C, tile_n, chunk):
    """Fused per-tile partial-sum kernel ('mean'/'sum' paths)."""
    n_chunks = tile_n // chunk

    def kernel(iif_ref, pred_ref, label_ref, out_ref):
        iif = iif_ref[...]                                           # (1, C)
        ones_c = jnp.ones((C, 128), jnp.float32)
        col = jax.lax.broadcasted_iota(jnp.int32, (1, C), 1)

        def body(c, acc):
            start = pl.multiple_of(c * chunk, chunk)
            per_row = _per_chunk_losses(iif, ones_c, col,
                                        pred_ref, label_ref, start, chunk)
            return acc + jnp.sum(per_row, axis=0, keepdims=True)

        tile_sum = jax.lax.fori_loop(0, n_chunks, body,
                                     jnp.zeros((1, 1), jnp.float32),
                                     unroll=True)
        # Contract with the wrapper: every element of the (8, 128) block holds
        # this tile's loss sum; the wrapper reads element [0, 0] of each block.
        out_ref[...] = jnp.broadcast_to(tile_sum, out_ref.shape)

    return kernel


def _make_none_kernel(C, tile_n, chunk):
    """Per-sample losses ('none' reduction / use_cums path)."""
    n_chunks = tile_n // chunk

    def kernel(iif_ref, pred_ref, label_ref, out_ref):
        iif = iif_ref[...]
        ones_c = jnp.ones((C, 128), jnp.float32)
        col = jax.lax.broadcasted_iota(jnp.int32, (1, C), 1)

        @pl.loop(0, n_chunks, unroll=True)
        def _(c):
            start = pl.multiple_of(c * chunk, chunk)
            out_ref[pl.ds(start, chunk), :] = _per_chunk_losses(
                iif, ones_c, col, pred_ref, label_ref, start, chunk)

    return kernel


# ----------------------------------------------------------------------------
# Wrappers
# ----------------------------------------------------------------------------
def _pad_inputs(cls_score, label, tile_n):
    """Pad N up to a multiple of tile_n; padded rows use ignore_index."""
    N = cls_score.shape[0]
    N_pad = _round_up(N, tile_n)
    label = label.astype(jnp.int32)
    if N_pad != N:
        cls_score = jnp.pad(cls_score, ((0, N_pad - N), (0, 0)))
        label = jnp.pad(label, ((0, N_pad - N),), constant_values=IGNORE_INDEX)
    return cls_score, label, N_pad


def _common_specs(C, tile_n):
    return [
        pl.BlockSpec((1, C), lambda i: (0, 0)),        # iif_weights (resident)
        pl.BlockSpec((tile_n, C), lambda i: (i, 0)),   # logits (native dtype)
        pl.BlockSpec((tile_n, 1), lambda i: (i, 0)),   # labels
    ]


def _cost_estimate(N_pad, C, itemsize, out_bytes):
    return pl.CostEstimate(
        flops=int(N_pad * (4 * C * 128 + 12 * C)),     # 2 ones-matmuls + VPU work
        transcendentals=int(N_pad * C + N_pad),        # exp/element + log/row
        bytes_accessed=int(N_pad * C * itemsize + N_pad * 4 + C * 4 + out_bytes),
    )


_COMPILER_PARAMS = pltpu.CompilerParams(
    dimension_semantics=("parallel",),
    vmem_limit_bytes=_VMEM_LIMIT,
)


def fasa_iif_loss_sum(cls_score, label, iif_weights, *, tile_n=None):
    """Sum over samples of CE(cls_score * iif_weights, label); ignored rows = 0."""
    N, C = cls_score.shape
    itemsize = int(np.dtype(cls_score.dtype).itemsize)
    tile_n, chunk = _resolve_tile(N, C, itemsize, tile_n)
    cls_p, lbl_p, N_pad = _pad_inputs(cls_score, label, tile_n)
    num_tiles = N_pad // tile_n
    label2d = lbl_p.reshape(N_pad, 1)
    iif2d = iif_weights.reshape(1, C).astype(jnp.float32)

    out = pl.pallas_call(
        _make_sum_kernel(C, tile_n, chunk),
        out_shape=jax.ShapeDtypeStruct((8, num_tiles * 128), jnp.float32),
        grid_spec=pltpu.PrefetchScalarGridSpec(
            num_scalar_prefetch=0,
            grid=(num_tiles,),
            in_specs=_common_specs(C, tile_n),
            out_specs=pl.BlockSpec((8, 128), lambda i: (0, i)),
        ),
        compiler_params=_COMPILER_PARAMS,
        cost_estimate=_cost_estimate(N_pad, C, itemsize, num_tiles * 8 * 128 * 4),
    )(iif2d, cls_p, label2d)

    # One representative element per tile block -> tiny host-side reduce.
    partials = out.reshape(8, num_tiles, 128)[0, :, 0]
    return jnp.sum(partials)


def fasa_iif_per_sample_loss(cls_score, label, iif_weights, *, tile_n=None):
    """Per-sample CE losses, shape (N,) (reduction='none' / use_cums path)."""
    N, C = cls_score.shape
    itemsize = int(np.dtype(cls_score.dtype).itemsize)
    tile_n, chunk = _resolve_tile(N, C, itemsize, tile_n)
    cls_p, lbl_p, N_pad = _pad_inputs(cls_score, label, tile_n)
    num_tiles = N_pad // tile_n
    label2d = lbl_p.reshape(N_pad, 1)
    iif2d = iif_weights.reshape(1, C).astype(jnp.float32)

    losses = pl.pallas_call(
        _make_none_kernel(C, tile_n, chunk),
        out_shape=jax.ShapeDtypeStruct((N_pad, 1), jnp.float32),
        grid_spec=pltpu.PrefetchScalarGridSpec(
            num_scalar_prefetch=0,
            grid=(num_tiles,),
            in_specs=_common_specs(C, tile_n),
            out_specs=pl.BlockSpec((tile_n, 1), lambda i: (i, 0)),
        ),
        compiler_params=_COMPILER_PARAMS,
        cost_estimate=_cost_estimate(N_pad, C, itemsize, N_pad * 4),
    )(iif2d, cls_p, label2d)
    return losses.reshape(N_pad)[:N]


def fasa_iif_loss(cls_score, label, iif_weights, *, loss_weight=1.0,
                  reduction="mean", avg_factor=None, tile_n=None):
    """FasaIIFLoss.forward (weight=None, class_weight=None, use_cums=False)."""
    N = cls_score.shape[0]
    if reduction == "none":
        loss = fasa_iif_per_sample_loss(cls_score, label, iif_weights,
                                        tile_n=tile_n)
    else:
        total = fasa_iif_loss_sum(cls_score, label, iif_weights, tile_n=tile_n)
        if reduction == "sum":
            loss = total
        else:  # "mean": matches weight_reduce_loss(avg_factor=None) -> mean over N
            denom = jnp.float32(N) if avg_factor is None else avg_factor
            loss = total / denom
    return loss_weight * loss


# ----------------------------------------------------------------------------
# Reference + self-test
# ----------------------------------------------------------------------------
def _reference_per_sample(cls_score, label, iif_weights):
    x = np.asarray(cls_score, np.float32) * np.asarray(iif_weights, np.float32)
    lbl = np.asarray(label)
    m = x.max(axis=-1, keepdims=True)
    lse = m[:, 0] + np.log(np.exp(x - m).sum(axis=-1))
    valid = lbl != IGNORE_INDEX
    tgt = np.where(valid, x[np.arange(x.shape[0]), np.where(valid, lbl, 0)], 0.0)
    return np.where(valid, lse - tgt, 0.0)


if __name__ == "__main__":
    # Small, module-consistent shapes: num_classes=127 -> C = num_classes + 1 = 128
    num_classes = 127
    C = num_classes + 1

    key = jax.random.PRNGKey(0)

    # Deterministic stand-in for the CSV-loaded iif weights:
    # mimic `iif_weights[1:] + [1.0]` (background weight == 1.0).
    base = 1.0 + 0.5 * jnp.sin(jnp.arange(C, dtype=jnp.float32) * 0.1) ** 2
    iif_weights = base.at[-1].set(1.0).reshape(1, C)
    # TODO(synk): use_cums branch (per-class running sums) is host-side module
    # state, not implemented in the kernel.

    # --- Case 1: f32 logits, N not a multiple of 8 (exercises padding), mean --
    N1 = 37
    k1, k2, key = jax.random.split(key, 3)
    cls1 = jax.random.normal(k1, (N1, C), dtype=jnp.float32)
    lbl1 = jax.random.randint(k2, (N1,), 0, C, dtype=jnp.int32)
    lbl1 = lbl1.at[3].set(IGNORE_INDEX)  # ignored sample

    loss1 = jax.block_until_ready(
        fasa_iif_loss(cls1, lbl1, iif_weights, reduction="mean"))
    sum1 = jax.block_until_ready(
        fasa_iif_loss(cls1, lbl1, iif_weights, reduction="sum"))
    ref_per1 = _reference_per_sample(np.asarray(cls1), np.asarray(lbl1),
                                     np.asarray(iif_weights))
    assert np.allclose(np.asarray(loss1), ref_per1.mean(), rtol=1e-5, atol=1e-5), (
        loss1, ref_per1.mean())
    assert np.allclose(np.asarray(sum1), ref_per1.sum(), rtol=1e-5, atol=1e-4), (
        sum1, ref_per1.sum())

    # --- Case 2: bf16 logits (native-dtype DMA), multi-tile grid, mean + none --
    N2 = 300
    k3, k4, key = jax.random.split(key, 3)
    cls2 = jax.random.normal(k3, (N2, C), dtype=jnp.float32).astype(jnp.bfloat16)
    lbl2 = jax.random.randint(k4, (N2,), 0, C, dtype=jnp.int32)
    lbl2 = lbl2.at[0].set(IGNORE_INDEX).at[100].set(IGNORE_INDEX)

    loss2 = jax.block_until_ready(
        fasa_iif_loss(cls2, lbl2, iif_weights, reduction="mean"))       # auto tile
    per2 = jax.block_until_ready(
        fasa_iif_loss(cls2, lbl2, iif_weights, reduction="none", tile_n=64))

    cls2_f32 = np.asarray(cls2.astype(jnp.float32))  # kernel math is bf16->f32
    ref_per2 = _reference_per_sample(cls2_f32, np.asarray(lbl2),
                                     np.asarray(iif_weights))
    assert np.allclose(np.asarray(loss2), ref_per2.mean(), rtol=1e-4, atol=1e-4), (
        loss2, ref_per2.mean())
    assert np.allclose(np.asarray(per2), ref_per2, rtol=1e-4, atol=1e-4)

    print("KERNEL_OK")
</pallas_src>

<mosaic_0001>
module attributes {stable_mosaic.version = 11 : i64} {
  func.func @kernel(%arg0: i32, %arg1: memref<1x128xf32, #tpu.memory_space<vmem>>, %arg2: memref<16x128xf32, #tpu.memory_space<vmem>>, %arg3: memref<16x1xi32, #tpu.memory_space<vmem>>, %arg4: memref<8x128xf32, #tpu.memory_space<vmem>>) attributes {dimension_semantics = [#tpu.dimension_semantics<parallel>], iteration_bounds = array<i64: 3>, scalar_prefetch = 0 : i64, scratch_operands = 0 : i64, tpu.core_type = #tpu.core_type<tc>, window_params = [{pipeline_mode = #tpu.pipeline_mode<synchronous>, transform_indices = @transform_0, window_bounds = array<i64: 1, 128>}, {transform_indices = @transform_1, window_bounds = array<i64: 16, 128>}, {transform_indices = @transform_2, window_bounds = array<i64: 16, 1>}, {transform_indices = @transform_3, window_bounds = array<i64: 8, 128>}]} {
    %c0 = arith.constant 0 : index
    %c0_0 = arith.constant 0 : index
    %0 = vector.load %arg1[%c0, %c0_0] : memref<1x128xf32, #tpu.memory_space<vmem>>, vector<1x128xf32>
    %cst = arith.constant 1.000000e+00 : f32
    %1 = vector.broadcast %cst : f32 to vector<128x128xf32>
    %2 = tpu.iota {dimensions = array<i32: 1>} : vector<1x128xi32>
    %cst_1 = arith.constant 0.000000e+00 : f32
    %3 = vector.broadcast %cst_1 : f32 to vector<1x1xf32>
    %c0_i32 = arith.constant 0 : i32
    %c16_i32 = arith.constant 16 : i32
    %4 = arith.muli %c0_i32, %c16_i32 : i32
    %5 = tpu.assume_multiple %4, 16 : i32
    %6 = arith.index_cast %5 : i32 to index
    %c0_2 = arith.constant 0 : index
    %7 = vector.load %arg2[%6, %c0_2] : memref<16x128xf32, #tpu.memory_space<vmem>>, vector<16x128xf32>
    %8 = vector.broadcast %0 : vector<1x128xf32> to vector<16x128xf32>
    %9 = arith.mulf %7, %8 : vector<16x128xf32>
    %10 = arith.index_cast %5 : i32 to index
    %c0_3 = arith.constant 0 : index
    %11 = vector.load %arg3[%10, %c0_3] : memref<16x1xi32, #tpu.memory_space<vmem>>, vector<16x1xi32>
    %cst_4 = arith.constant dense<0xFF800000> : vector<16xf32>
    %12 = vector.multi_reduction <maximumf>, %9, %cst_4 [1] : vector<16x128xf32> to vector<16xf32>
    %13 = vector.shape_cast %12 : vector<16xf32> to vector<16x1xf32>
    %14 = vector.broadcast %13 : vector<16x1xf32> to vector<16x128xf32>
    %15 = arith.subf %9, %14 : vector<16x128xf32>
    %16 = math.exp %15 : vector<16x128xf32>
    %cst_5 = arith.constant dense<0.000000e+00> : vector<16x128xf32>
    %17 = tpu.matmul %16, %1, %cst_5 {dimension_numbers = #tpu.dot_dimension_numbers<[1], [0], [0], [1], [0, 0, 1, 1], [], []>, precision = #tpu.contract_precision<fp32>} : vector<16x128xf32>, vector<128x128xf32>, vector<16x128xf32> -> vector<16x128xf32>
    %18 = vector.extract_strided_slice %17 {offsets = [0, 0], sizes = [16, 1], strides = [1, 1]} : vector<16x128xf32> to vector<16x1xf32>
    %19 = vector.broadcast %2 : vector<1x128xi32> to vector<16x128xi32>
    %20 = vector.broadcast %11 : vector<16x1xi32> to vector<16x128xi32>
    %21 = arith.cmpi eq, %19, %20 : vector<16x128xi32>
    %cst_6 = arith.constant 0.000000e+00 : f32
    %22 = vector.broadcast %cst_6 : f32 to vector<16x128xf32>
    %23 = arith.select %21, %9, %22 : vector<16x128xi1>, vector<16x128xf32>
    %cst_7 = arith.constant dense<0.000000e+00> : vector<16x128xf32>
    %24 = tpu.matmul %23, %1, %cst_7 {dimension_numbers = #tpu.dot_dimension_numbers<[1], [0], [0], [1], [0, 0, 1, 1], [], []>, precision = #tpu.contract_precision<fp32>} : vector<16x128xf32>, vector<128x128xf32>, vector<16x128xf32> -> vector<16x128xf32>
    %25 = vector.extract_strided_slice %24 {offsets = [0, 0], sizes = [16, 1], strides = [1, 1]} : vector<16x128xf32> to vector<16x1xf32>
    %c-100_i32 = arith.constant -100 : i32
    %26 = vector.broadcast %c-100_i32 : i32 to vector<16x1xi32>
    %27 = arith.cmpi ne, %11, %26 : vector<16x1xi32>
    %28 = arith.extui %27 : vector<16x1xi1> to vector<16x1xi32>
    %29 = arith.sitofp %28 : vector<16x1xi32> to vector<16x1xf32>
    %30 = math.log %18 : vector<16x1xf32>
    %31 = arith.addf %13, %30 : vector<16x1xf32>
    %32 = arith.subf %31, %25 : vector<16x1xf32>
    %33 = arith.mulf %32, %29 : vector<16x1xf32>
    %cst_8 = arith.constant dense<0.000000e+00> : vector<1xf32>
    %34 = vector.multi_reduction <add>, %33, %cst_8 [0] : vector<16x1xf32> to vector<1xf32>
    %35 = vector.shape_cast %34 : vector<1xf32> to vector<1x1xf32>
    %36 = arith.addf %3, %35 : vector<1x1xf32>
    %c1_i32 = arith.constant 1 : i32
    %37 = vector.shape_cast %36 : vector<1x1xf32> to vector<1x1xf32>
    %38 = vector.broadcast %37 : vector<1x1xf32> to vector<8x128xf32>
    %c0_9 = arith.constant 0 : index
    %c0_10 = arith.constant 0 : index
    %39 = vector.load %arg4[%c0_9, %c0_10] : memref<8x128xf32, #tpu.memory_space<vmem>>, vector<8x128xf32>
    tpu.vector_store %arg4[%c0_9, %c0_10], %38 {strides = array<i32>} : memref<8x128xf32, #tpu.memory_space<vmem>>, vector<8x128xf32>,
    return
  }
  func.func @transform_0(%arg0: i32) -> (i32, i32) {
    %c0_i32 = arith.constant 0 : i32
    %c0_i32_0 = arith.constant 0 : i32
    %c0_i32_1 = arith.constant 0 : i32
    return %c0_i32, %c0_i32_0 : i32, i32
  }
  func.func @transform_1(%arg0: i32) -> (i32, i32) {
    %c0_i32 = arith.constant 0 : i32
    %c0_i32_0 = arith.constant 0 : i32
    return %arg0, %c0_i32 : i32, i32
  }
  func.func @transform_2(%arg0: i32) -> (i32, i32) {
    %c0_i32 = arith.constant 0 : i32
    %c0_i32_0 = arith.constant 0 : i32
    return %arg0, %c0_i32 : i32, i32
  }
  func.func @transform_3(%arg0: i32) -> (i32, i32) {
    %c0_i32 = arith.constant 0 : i32
    %c0_i32_0 = arith.constant 0 : i32
    return %c0_i32, %arg0 : i32, i32
  }
}

</mosaic_0001>

<llo_original>
// kernel: tpu_custom_call.1
$region0: #{tpu_custom_call.1}
  #allocation0 [shape = 'u32[]', space=smem, size = 0x4, offset = 0x4, fixed_abs, tag = 'smem constant byte address 0x4 - core index']
  #allocation1 [shape = 'u32[144,128]{1,0:T(1,128)}', space=vmem, size = 0x12000, scoped, tag = 'internal scratch']
  %s0 = inlined_call_operand.vmem [shape: f32[1,128], index: 0, kind: input, shape index: {}]
  %s1 = inlined_call_operand.vmem [shape: f32[48,128], index: 1, kind: input, shape index: {}]
  %s2 = inlined_call_operand.vmem [shape: s32[48,1], index: 2, kind: input, shape index: {}]
  %s3 = inlined_call_operand.hbm [shape: f32[8,384], index: 3, kind: output, shape index: {}]
  %s4 = sld [smem:[#allocation0]]
  $region45: #{tpu_custom_call.1} parent=0
    _
  %s6 = ssub.s32 1, %s4
  %s7 = scalar_select 0, %s6, %s4
  $region1: #{tpu_custom_call.1} parent=0
    #allocation2 [shape = 'u8[8192]{0}', space=vmem, size = 0x2000, scoped, tag = 'output window, operand 0']
    #allocation3 [shape = 's32[2]{0}', space=sflag, size = 0x8, scoped, tag = 'scoped memory for tpu_custom_call.1']
    %8 = vsyncpa [#allocation3], 0
    %s9 = scalar_lea.sflag [#allocation3], 1
    %10 = vsyncpa %s9, 0
    loop: start=0, step=1, limit=5
    $region2: #{tpu_custom_call.1} parent=1 // loop_pre_header
      _
    $region3: #{tpu_custom_call.1} parent=1 // loop_header
      %s12 = sphi 0, %s16
      %p13 = scmp.ge.s32.totalorder %s12, 5
      %s20 = sphi 0, %s20
      %s22 = sphi 0, %s20
      %s23 = sphi 0, %s22
      %s37 = sphi 0, %s23
      %s43 = sphi 0, %s45
      %s46 = sphi 0, %s43
      %s47 = sphi 0, %s46
      %s63 = sphi 0, %s47
      %s69 = sphi 0, %s71
      %s72 = sphi 0, %s69
      %s73 = sphi 0, %s72
      %s89 = sphi 0, %s73
      %s95 = sphi 0, %s97
      %s98 = sphi 0, %s95
      %s99 = sphi 0, %s98
      %s115 = sphi 0, %s99
    $region4: #{tpu_custom_call.1} parent=1 // loop_header_branch
      %15 = sbr.rel (%p13) target = $region8
    $region5: #{tpu_custom_call.1} parent=1 // loop_body
      %s17 = ssub.s32 %s12, 1
      %s18 = ssub.s32 %s12, 2
      %s19 = sadd.s32 %s12, 1
      %s21 = sadd.s32 %s20, 1
      %p24 = scmp.eq.s32.totalorder %s12, 2
      %p25 = scmp.ne.s32.totalorder %s20, %s22
      %p26 = scmp.eq.s32.totalorder %s12, 0
      %p27 = por %p25, %p26
      %p28 = scmp.ne.s32.totalorder %s20, %s22
      %p29 = scmp.eq.s32.totalorder %s17, 2
      %p30 = por %p28, %p29
      %p31 = scmp.ne.s32.totalorder %s22, %s23
      %p32 = scmp.eq.s32.totalorder %s17, 0
      %p33 = por %p31, %p32
      %p34 = scmp.ne.s32.totalorder %s22, %s23
      %p35 = scmp.eq.s32.totalorder %s18, 2
      %p36 = por %p34, %p35
      %p38 = scmp.ne.s32.totalorder %s23, %s37
      %p39 = scmp.eq.s32.totalorder %s18, 0
      %p40 = por %p38, %p39
      %s41 = ssub.s32 %s12, %s19
      %p42 = scmp.eq.s32.totalorder %s41, 0
      %s44 = sadd.s32 %s43, 1
      %s45 = scalar_select %p42, %s43, %s44
      %p48 = pneg %p42
      %p49 = scmp.eq.s32.totalorder %s12, 2
      %p50 = por %p48, %p49
      %p51 = scmp.ne.s32.totalorder %s43, %s46
      %p52 = scmp.eq.s32.totalorder %s12, 0
      %p53 = por %p51, %p52
      %p54 = scmp.ne.s32.totalorder %s43, %s46
      %p55 = scmp.eq.s32.totalorder %s17, 2
      %p56 = por %p54, %p55
      %p57 = scmp.ne.s32.totalorder %s46, %s47
      %p58 = scmp.eq.s32.totalorder %s17, 0
      %p59 = por %p57, %p58
      %p60 = scmp.ne.s32.totalorder %s46, %s47
      %p61 = scmp.eq.s32.totalorder %s18, 2
      %p62 = por %p60, %p61
      %p64 = scmp.ne.s32.totalorder %s47, %s63
      %p65 = scmp.eq.s32.totalorder %s18, 0
      %p66 = por %p64, %p65
      %s67 = ssub.s32 %s12, %s19
      %p68 = scmp.eq.s32.totalorder %s67, 0
      %s70 = sadd.s32 %s69, 1
      %s71 = scalar_select %p68, %s69, %s70
      %p74 = pneg %p68
      %p75 = scmp.eq.s32.totalorder %s12, 2
      %p76 = por %p74, %p75
      %p77 = scmp.ne.s32.totalorder %s69, %s72
      %p78 = scmp.eq.s32.totalorder %s12, 0
      %p79 = por %p77, %p78
      %p80 = scmp.ne.s32.totalorder %s69, %s72
      %p81 = scmp.eq.s32.totalorder %s17, 2
      %p82 = por %p80, %p81
      %p83 = scmp.ne.s32.totalorder %s72, %s73
      %p84 = scmp.eq.s32.totalorder %s17, 0
      %p85 = por %p83, %p84
      %p86 = scmp.ne.s32.totalorder %s72, %s73
      %p87 = scmp.eq.s32.totalorder %s18, 2
      %p88 = por %p86, %p87
      %p90 = scmp.ne.s32.totalorder %s73, %s89
      %p91 = scmp.eq.s32.totalorder %s18, 0
      %p92 = por %p90, %p91
      %s93 = ssub.s32 %s12, %s19
      %p94 = scmp.eq.s32.totalorder %s93, 0
      %s96 = sadd.s32 %s95, 1
      %s97 = scalar_select %p94, %s95, %s96
      %p100 = pneg %p94
      %p101 = scmp.eq.s32.totalorder %s12, 2
      %p102 = por %p100, %p101
      %p103 = scmp.ne.s32.totalorder %s95, %s98
      %p104 = scmp.eq.s32.totalorder %s12, 0
      %p105 = por %p103, %p104
      %p106 = scmp.ne.s32.totalorder %s95, %s98
      %p107 = scmp.eq.s32.totalorder %s17, 2
      %p108 = por %p106, %p107
      %p109 = scmp.ne.s32.totalorder %s98, %s99
      %p110 = scmp.eq.s32.totalorder %s17, 0
      %p111 = por %p109, %p110
      %p112 = scmp.ne.s32.totalorder %s98, %s99
      %p113 = scmp.eq.s32.totalorder %s18, 2
      %p114 = por %p112, %p113
      %p116 = scmp.ne.s32.totalorder %s99, %s115
      %p117 = scmp.eq.s32.totalorder %s18, 0
      %p118 = por %p116, %p117
      %p119 = scmp.le.s32.totalorder 1, %s12
      %p120 = scmp.lt.s32.totalorder %s12, 4
      %p121 = pnand %p119, %p120
      %p122 = pneg %p121
      // Predicated region
      $region9: #{tpu_custom_call.1} parent=5 // pred_check
        _
      $region10: #{tpu_custom_call.1} parent=5 // pred_check_branch
        %124 = sbr.rel (%p121) target = $region12
      $region11: #{tpu_custom_call.1} parent=5 // pred_region
        %s125 = ssub.s32 %s12, 1
        // Predicated region
        $region13: #{tpu_custom_call.1} parent=11 // pred_check
          %p126 = pneg %p33
        $region14: #{tpu_custom_call.1} parent=11 // pred_check_branch
          %128 = sbr.rel (%p126) target = $region16
        $region15: #{tpu_custom_call.1} parent=11 // pred_region
          _
        $region16: #{tpu_custom_call.1} parent=11 // pred_fallthru
          _
      $region12: #{tpu_custom_call.1} parent=5 // pred_fallthru
        _
      %p129 = scmp.lt.s32.totalorder %s12, 3
      // Predicated region
      $region17: #{tpu_custom_call.1} parent=5 // pred_check
        %p130 = pneg %p129
      $region18: #{tpu_custom_call.1} parent=5 // pred_check_branch
        %132 = sbr.rel (%p130) target = $region20
      $region19: #{tpu_custom_call.1} parent=5 // pred_region
        // Predicated region
        $region21: #{tpu_custom_call.1} parent=19 // pred_check
          %p133 = pneg %p53
        $region22: #{tpu_custom_call.1} parent=19 // pred_check_branch
          %135 = sbr.rel (%p133) target = $region24
        $region23: #{tpu_custom_call.1} parent=19 // pred_region
          %s136 = smul.u32 2, %s12
          %p137 = scmp.lt.s32.totalorder %s136, 5
          %s138 = scalar_select %p137, %s136, 5
          %s139 = smul.addr %s138, 8
          %s140 = scalar_lea.vmem %s1, %s139
          %s141 = smul.u32 2, %s12
        $region24: #{tpu_custom_call.1} parent=19 // pred_fallthru
          _
        // Predicated region
        $region25: #{tpu_custom_call.1} parent=19 // pred_check
          %p142 = pneg %p79
        $region26: #{tpu_custom_call.1} parent=19 // pred_check_branch
          %144 = sbr.rel (%p142) target = $region28
        $region27: #{tpu_custom_call.1} parent=19 // pred_region
          %s145 = smul.u32 2, %s12
          %p146 = scmp.lt.s32.totalorder %s145, 5
          %s147 = scalar_select %p146, %s145, 5
          %s148 = smul.addr %s147, 8
          %s149 = scalar_lea.vmem %s2, %s148
          %s150 = smul.u32 2, %s12
        $region28: #{tpu_custom_call.1} parent=19 // pred_fallthru
          _
      $region20: #{tpu_custom_call.1} parent=5 // pred_fallthru
        _
      %p151 = scmp.le.s32.totalorder 1, %s12
      %p152 = scmp.lt.s32.totalorder %s12, 4
      %p153 = pnand %p151, %p152
      %p154 = pneg %p153
      // Predicated region
      $region29: #{tpu_custom_call.1} parent=5 // pred_check
        _
      $region30: #{tpu_custom_call.1} parent=5 // pred_check_branch
        %156 = sbr.rel (%p153) target = $region32
      $region31: #{tpu_custom_call.1} parent=5 // pred_region
        %s157 = ssub.s32 %s12, 1
        %p158 = pneg %p33
        %p159 = pneg %p30
        %s160 = smul.u32 2, %s17
        %p161 = scmp.lt.s32.totalorder %s160, 5
        %s162 = scalar_select %p161, %s160, 5
        %s163 = smul.addr %s162, 8
        %s164 = scalar_lea.vmem %s1, %s163
        %p165 = pneg %p59
        %p166 = pneg %p56
        %s167 = smul.u32 2, %s17
        %p168 = scmp.lt.s32.totalorder %s167, 5
        %s169 = scalar_select %p168, %s167, 5
        %s170 = smul.addr %s169, 8
        %s171 = scalar_lea.vmem %s2, %s170
        %p172 = pneg %p85
        %p173 = pneg %p82
        %p174 = pneg %p111
        %p175 = pneg %p108
        %s176 = sand.u32 %s98, 1
        %s177 = scalar_lea.sflag [#allocation3], %s176
        %s178 = sand.u32 %s98, 1
        %s179 = smul.addr %s178, 8
        %s180 = scalar_lea.vmem [#allocation2], %s179
        %s181 = smul.u32 2, %s17
        %p182 = scmp.lt.s32.totalorder %s181, 5
        %s183 = scalar_select %p182, %s181, 5
        %s184 = smul.addr %s183, 8
        %s185 = scalar_lea.vmem %s1, %s184
        %s186 = smul.u32 2, %s17
        %s187 = smul.u32 2, %s17
        %p188 = scmp.lt.s32.totalorder %s187, 5
        %s189 = scalar_select %p188, %s187, 5
        %s190 = smul.addr %s189, 8
        %s191 = scalar_lea.vmem %s2, %s190
        %s192 = smul.u32 2, %s17
        %v193 = vld [vmem:[%s0] sm:$0x1]
        %v194 = vlaneseq
        %v195 = vand.u32 %v194, 127
        %v196 = vld [vmem:[%s185] sm:$0xff]
        %v197 = vld [vmem:[%s185 + $0x8] sm:$0xff]
        %v199 = vlaneseq
        %v200 = vshrl.u32 %v199, 7
        %v201 = vsub.s32 0, %v200
        %v202 = vrot.slane %v193, %v201
        %v204 = vmul.f32 %v196, %v202
        %v205 = vmul.f32 %v197, %v202
        %v206 = vld [vmem:[%s191] sm:$0xff]
        %v207 = vld [vmem:[%s191 + $0x8] sm:$0xff]
        %208 = vmax.xlane.f32.xlu0 %v204
        %v209 = vpop.xlane.xlu0 %208
        %210 = vmax.xlane.f32.xlu0 %v205
        %v211 = vpop.xlane.xlu0 %210
        %v212 = vsub.f32 %v204, %v209
        %v213 = vsub.f32 %v205, %v211
        %v214 = vmul.f32 %v212, 1.442695
        %v215 = vpow.pop %v214
        %v216 = vmul.f32 %v213, 1.442695
        %v217 = vpow.pop %v216
        %218 = vmatprep.subr.mxu0 0.0
        %219 = vmatpush1.msra.mxu0 1.0
        %220 = vmatprep.subr.mxu0 0.0
        %221 = vmatpush1.msra.mxu0 1.0
        %222 = vmatprep.subr.mxu0 0.0
        %223 = vmatpush1.msra.mxu0 1.0
        %224 = vmatprep.subr.mxu0 0.0
        %225 = vmatpush1.msra.mxu0 1.0
        %226 = vmatprep.subr.mxu0 0.0
        %227 = vmatpush1.msra.mxu0 1.0
        %228 = vmatprep.subr.mxu0 0.0
        %229 = vmatpush1.msra.mxu0 1.0
        %230 = vmatprep.subr.mxu0 0.0
        %231 = vmatpush1.msra.mxu0 1.0
        %232 = vmatprep.subr.mxu0 0.0
        %233 = vmatpush1.msra.mxu0 1.0
        %234 = vmatprep.subr.mxu0 0.0
        %235 = vmatpush1.msra.mxu0 1.0
        %236 = vmatprep.subr.mxu0 0.0
        %237 = vmatpush1.msra.mxu0 1.0
        %238 = vmatprep.subr.mxu0 0.0
        %239 = vmatpush1.msra.mxu0 1.0
        %240 = vmatprep.subr.mxu0 0.0
        %241 = vmatpush1.msra.mxu0 1.0
        %242 = vmatprep.subr.mxu0 0.0
        %243 = vmatpush1.msra.mxu0 1.0
        %244 = vmatprep.subr.mxu0 0.0
        %245 = vmatpush1.msra.mxu0 1.0
        %246 = vmatprep.subr.mxu0 0.0
        %247 = vmatpush1.msra.mxu0 1.0
        %248 = vmatprep.subr.mxu0 0.0
        %249 = vmatpush1.msra.mxu0 1.0
        %250 = vmatprep.subr.mxu0 0.0
        %251 = vmatpush1.msra.mxu0 0.0
        %252 = vmatprep.subr.mxu0 0.0
        %253 = vmatpush1.msra.mxu0 0.0
        %254 = vmatprep.subr.mxu0 0.0
        %255 = vmatpush1.msra.mxu0 0.0
        %256 = vmatprep.subr.mxu0 0.0
        %257 = vmatpush1.msra.mxu0 0.0
        %258 = vmatprep.subr.mxu0 0.0
        %259 = vmatpush1.msra.mxu0 0.0
        %260 = vmatprep.subr.mxu0 0.0
        %261 = vmatpush1.msra.mxu0 0.0
        %262 = vmatprep.subr.mxu0 0.0
        %263 = vmatpush1.msra.mxu0 0.0
        %264 = vmatprep.subr.mxu0 0.0
        %265 = vmatpush1.msra.mxu0 0.0
        %266 = vmatprep.subr.mxu0 0.0
        %267 = vmatpush1.msra.mxu0 0.0
        %268 = vmatprep.subr.mxu0 0.0
        %269 = vmatpush1.msra.mxu0 0.0
        %270 = vmatprep.subr.mxu0 0.0
        %271 = vmatpush1.msra.mxu0 0.0
        %272 = vmatprep.subr.mxu0 0.0
        %273 = vmatpush1.msra.mxu0 0.0
        %274 = vmatprep.subr.mxu0 0.0
        %275 = vmatpush1.msra.mxu0 0.0
        %276 = vmatprep.subr.mxu0 0.0
        %277 = vmatpush1.msra.mxu0 0.0
        %278 = vmatprep.subr.mxu0 0.0
        %279 = vmatpush1.msra.mxu0 0.0
        %280 = vmatprep.subr.mxu0 0.0
        %281 = vmatpush1.msra.mxu0 0.0
        %282 = vmatprep.mubr.f32.mxu0 0.0
        %v283 = vand.u32 %v215, 4294901760
        %v284 = vsub.f32 %v215, %v283
        %v285 = vand.u32 %v284, 4294901760
        %v286 = vsub.f32 %v284, %v285
        %v287 = vand.u32 %v286, 4294901760
        %288 = vmatmul.mubr.f32.gmra.mrb[0].mxu0 %v287
        %v289 = vpop.f32.mrb[0].mxu0
        %v290 = vadd.f32 0.0, %v289
        %v291 = vpop.f32.mrb[0].mxu0
        %292 = vmatprep.mubr.f32.mxu0 0.0
        %v293 = vand.u32 %v217, 4294901760
        %v294 = vsub.f32 %v217, %v293
        %v295 = vand.u32 %v294, 4294901760
        %v296 = vsub.f32 %v294, %v295
        %v297 = vand.u32 %v296, 4294901760
        %298 = vmatmul.mubr.f32.gmra.mrb[0].mxu0 %v297
        %v299 = vpop.f32.mrb[0].mxu0
        %v300 = vadd.f32 0.0, %v299
        %v301 = vpop.f32.mrb[0].mxu0
        %302 = vdwg.mxu0
        %303 = vmatprep.subr.mxu0 0.0
        %304 = vmatpush1.msra.mxu0 0.0
        %305 = vmatprep.subr.mxu0 0.0
        %306 = vmatpush1.msra.mxu0 0.0
        %307 = vmatprep.subr.mxu0 0.0
        %308 = vmatpush1.msra.mxu0 0.0
        %309 = vmatprep.subr.mxu0 0.0
        %310 = vmatpush1.msra.mxu0 0.0
        %311 = vmatprep.subr.mxu0 0.0
        %312 = vmatpush1.msra.mxu0 0.0
        %313 = vmatprep.subr.mxu0 0.0
        %314 = vmatpush1.msra.mxu0 0.0
        %315 = vmatprep.subr.mxu0 0.0
        %316 = vmatpush1.msra.mxu0 0.0
        %317 = vmatprep.subr.mxu0 0.0
        %318 = vmatpush1.msra.mxu0 0.0
        %319 = vmatprep.subr.mxu0 0.0
        %320 = vmatpush1.msra.mxu0 0.0
        %321 = vmatprep.subr.mxu0 0.0
        %322 = vmatpush1.msra.mxu0 0.0
        %323 = vmatprep.subr.mxu0 0.0
        %324 = vmatpush1.msra.mxu0 0.0
        %325 = vmatprep.subr.mxu0 0.0
        %326 = vmatpush1.msra.mxu0 0.0
        %327 = vmatprep.subr.mxu0 0.0
        %328 = vmatpush1.msra.mxu0 0.0
        %329 = vmatprep.subr.mxu0 0.0
        %330 = vmatpush1.msra.mxu0 0.0
        %331 = vmatprep.subr.mxu0 0.0
        %332 = vmatpush1.msra.mxu0 0.0
        %333 = vmatprep.subr.mxu0 0.0
        %334 = vmatpush1.msra.mxu0 0.0
        %335 = vmatprep.subr.mxu0 0.0
        %336 = vmatpush1.msra.mxu0 0.0
        %337 = vmatprep.subr.mxu0 0.0
        %338 = vmatpush1.msra.mxu0 0.0
        %339 = vmatprep.subr.mxu0 0.0
        %340 = vmatpush1.msra.mxu0 0.0
        %341 = vmatprep.subr.mxu0 0.0
        %342 = vmatpush1.msra.mxu0 0.0
        %343 = vmatprep.subr.mxu0 0.0
        %344 = vmatpush1.msra.mxu0 0.0
        %345 = vmatprep.subr.mxu0 0.0
        %346 = vmatpush1.msra.mxu0 0.0
        %347 = vmatprep.subr.mxu0 0.0
        %348 = vmatpush1.msra.mxu0 0.0
        %349 = vmatprep.subr.mxu0 0.0
        %350 = vmatpush1.msra.mxu0 0.0
        %351 = vmatprep.subr.mxu0 0.0
        %352 = vmatpush1.msra.mxu0 0.0
        %353 = vmatprep.subr.mxu0 0.0
        %354 = vmatpush1.msra.mxu0 0.0
        %355 = vmatprep.subr.mxu0 0.0
        %356 = vmatpush1.msra.mxu0 0.0
        %357 = vmatprep.subr.mxu0 0.0
        %358 = vmatpush1.msra.mxu0 0.0
        %359 = vmatprep.subr.mxu0 0.0
        %360 = vmatpush1.msra.mxu0 0.0
        %361 = vmatprep.subr.mxu0 0.0
        %362 = vmatpush1.msra.mxu0 0.0
        %363 = vmatprep.subr.mxu0 0.0
        %364 = vmatpush1.msra.mxu0 0.0
        %365 = vmatprep.subr.mxu0 0.0
        %366 = vmatpush1.msra.mxu0 0.0
        %367 = vmatprep.mubr.f32.mxu0 0.0
        %v368 = vand.u32 %v215, 4294901760
        %369 = vmatmul.mubr.f32.gmra.mrb[0].mxu0 %v368
        %v370 = vpop.f32.mrb[0].mxu0
        %v371 = vadd.f32 %v290, %v370
        %v372 = vpop.f32.mrb[0].mxu0
        %373 = vmatprep.mubr.f32.mxu0 0.0
        %v374 = vand.u32 %v217, 4294901760
        %375 = vmatmul.mubr.f32.gmra.mrb[0].mxu0 %v374
        %v376 = vpop.f32.mrb[0].mxu0
        %v377 = vadd.f32 %v300, %v376
        %v378 = vpop.f32.mrb[0].mxu0
        %379 = vdwg.mxu0
        %380 = vmatprep.subr.mxu0 0.0
        %381 = vmatpush1.msra.mxu0 0.0
        %382 = vmatprep.subr.mxu0 0.0
        %383 = vmatpush1.msra.mxu0 0.0
        %384 = vmatprep.subr.mxu0 0.0
        %385 = vmatpush1.msra.mxu0 0.0
        %386 = vmatprep.subr.mxu0 0.0
        %387 = vmatpush1.msra.mxu0 0.0
        %388 = vmatprep.subr.mxu0 0.0
        %389 = vmatpush1.msra.mxu0 0.0
        %390 = vmatprep.subr.mxu0 0.0
        %391 = vmatpush1.msra.mxu0 0.0
        %392 = vmatprep.subr.mxu0 0.0
        %393 = vmatpush1.msra.mxu0 0.0
        %394 = vmatprep.subr.mxu0 0.0
        %395 = vmatpush1.msra.mxu0 0.0
        %396 = vmatprep.subr.mxu0 0.0
        %397 = vmatpush1.msra.mxu0 0.0
        %398 = vmatprep.subr.mxu0 0.0
        %399 = vmatpush1.msra.mxu0 0.0
        %400 = vmatprep.subr.mxu0 0.0
        %401 = vmatpush1.msra.mxu0 0.0
        %402 = vmatprep.subr.mxu0 0.0
        %403 = vmatpush1.msra.mxu0 0.0
        %404 = vmatprep.subr.mxu0 0.0
        %405 = vmatpush1.msra.mxu0 0.0
        %406 = vmatprep.subr.mxu0 0.0
        %407 = vmatpush1.msra.mxu0 0.0
        %408 = vmatprep.subr.mxu0 0.0
        %409 = vmatpush1.msra.mxu0 0.0
        %410 = vmatprep.subr.mxu0 0.0
        %411 = vmatpush1.msra.mxu0 0.0
        %412 = vmatprep.subr.mxu0 0.0
        %413 = vmatpush1.msra.mxu0 0.0
        %414 = vmatprep.subr.mxu0 0.0
        %415 = vmatpush1.msra.mxu0 0.0
        %416 = vmatprep.subr.mxu0 0.0
        %417 = vmatpush1.msra.mxu0 0.0
        %418 = vmatprep.subr.mxu0 0.0
        %419 = vmatpush1.msra.mxu0 0.0
        %420 = vmatprep.subr.mxu0 0.0
        %421 = vmatpush1.msra.mxu0 0.0
        %422 = vmatprep.subr.mxu0 0.0
        %423 = vmatpush1.msra.mxu0 0.0
        %424 = vmatprep.subr.mxu0 0.0
        %425 = vmatpush1.msra.mxu0 0.0
        %426 = vmatprep.subr.mxu0 0.0
        %427 = vmatpush1.msra.mxu0 0.0
        %428 = vmatprep.subr.mxu0 0.0
        %429 = vmatpush1.msra.mxu0 0.0
        %430 = vmatprep.subr.mxu0 0.0
        %431 = vmatpush1.msra.mxu0 0.0
        %432 = vmatprep.subr.mxu0 0.0
        %433 = vmatpush1.msra.mxu0 0.0
        %434 = vmatprep.subr.mxu0 0.0
        %435 = vmatpush1.msra.mxu0 0.0
        %436 = vmatprep.subr.mxu0 0.0
        %437 = vmatpush1.msra.mxu0 0.0
        %438 = vmatprep.subr.mxu0 0.0
        %439 = vmatpush1.msra.mxu0 0.0
        %440 = vmatprep.subr.mxu0 0.0
        %441 = vmatpush1.msra.mxu0 0.0
        %442 = vmatprep.subr.mxu0 0.0
        %443 = vmatpush1.msra.mxu0 0.0
        %444 = vmatprep.mubr.f32.mxu0 0.0
        %v445 = vand.u32 %v215, 4294901760
        %v446 = vsub.f32 %v215, %v445
        %447 = vmatmul.mubr.f32.gmra.mrb[0].mxu0 %v446
        %v448 = vpop.f32.mrb[0].mxu0
        %v449 = vadd.f32 %v371, %v448
        %v450 = vpop.f32.mrb[0].mxu0
        %451 = vmatprep.mubr.f32.mxu0 0.0
        %v452 = vand.u32 %v217, 4294901760
        %v453 = vsub.f32 %v217, %v452
        %454 = vmatmul.mubr.f32.gmra.mrb[0].mxu0 %v453
        %v455 = vpop.f32.mrb[0].mxu0
        %v456 = vadd.f32 %v377, %v455
        %v457 = vpop.f32.mrb[0].mxu0
        %458 = vdwg.mxu0
        %459 = vmatprep.subr.mxu0 0.0
        %460 = vmatpush1.msra.mxu0 1.0
        %461 = vmatprep.subr.mxu0 0.0
        %462 = vmatpush1.msra.mxu0 1.0
        %463 = vmatprep.subr.mxu0 0.0
        %464 = vmatpush1.msra.mxu0 1.0
        %465 = vmatprep.subr.mxu0 0.0
        %466 = vmatpush1.msra.mxu0 1.0
        %467 = vmatprep.subr.mxu0 0.0
        %468 = vmatpush1.msra.mxu0 1.0
        %469 = vmatprep.subr.mxu0 0.0
        %470 = vmatpush1.msra.mxu0 1.0
        %471 = vmatprep.subr.mxu0 0.0
        %472 = vmatpush1.msra.mxu0 1.0
        %473 = vmatprep.subr.mxu0 0.0
        %474 = vmatpush1.msra.mxu0 1.0
        %475 = vmatprep.subr.mxu0 0.0
        %476 = vmatpush1.msra.mxu0 1.0
        %477 = vmatprep.subr.mxu0 0.0
        %478 = vmatpush1.msra.mxu0 1.0
        %479 = vmatprep.subr.mxu0 0.0
        %480 = vmatpush1.msra.mxu0 1.0
        %481 = vmatprep.subr.mxu0 0.0
        %482 = vmatpush1.msra.mxu0 1.0
        %483 = vmatprep.subr.mxu0 0.0
        %484 = vmatpush1.msra.mxu0 1.0
        %485 = vmatprep.subr.mxu0 0.0
        %486 = vmatpush1.msra.mxu0 1.0
        %487 = vmatprep.subr.mxu0 0.0
        %488 = vmatpush1.msra.mxu0 1.0
        %489 = vmatprep.subr.mxu0 0.0
        %490 = vmatpush1.msra.mxu0 1.0
        %491 = vmatprep.subr.mxu0 0.0
        %492 = vmatpush1.msra.mxu0 0.0
        %493 = vmatprep.subr.mxu0 0.0
        %494 = vmatpush1.msra.mxu0 0.0
        %495 = vmatprep.subr.mxu0 0.0
        %496 = vmatpush1.msra.mxu0 0.0
        %497 = vmatprep.subr.mxu0 0.0
        %498 = vmatpush1.msra.mxu0 0.0
        %499 = vmatprep.subr.mxu0 0.0
        %500 = vmatpush1.msra.mxu0 0.0
        %501 = vmatprep.subr.mxu0 0.0
        %502 = vmatpush1.msra.mxu0 0.0
        %503 = vmatprep.subr.mxu0 0.0
        %504 = vmatpush1.msra.mxu0 0.0
        %505 = vmatprep.subr.mxu0 0.0
        %506 = vmatpush1.msra.mxu0 0.0
        %507 = vmatprep.subr.mxu0 0.0
        %508 = vmatpush1.msra.mxu0 0.0
        %509 = vmatprep.subr.mxu0 0.0
        %510 = vmatpush1.msra.mxu0 0.0
        %511 = vmatprep.subr.mxu0 0.0
        %512 = vmatpush1.msra.mxu0 0.0
        %513 = vmatprep.subr.mxu0 0.0
        %514 = vmatpush1.msra.mxu0 0.0
        %515 = vmatprep.subr.mxu0 0.0
        %516 = vmatpush1.msra.mxu0 0.0
        %517 = vmatprep.subr.mxu0 0.0
        %518 = vmatpush1.msra.mxu0 0.0
        %519 = vmatprep.subr.mxu0 0.0
        %520 = vmatpush1.msra.mxu0 0.0
        %521 = vmatprep.subr.mxu0 0.0
        %522 = vmatpush1.msra.mxu0 0.0
        %523 = vmatprep.mubr.f32.mxu0 0.0
        %v524 = vand.u32 %v215, 4294901760
        %v525 = vsub.f32 %v215, %v524
        %v526 = vand.u32 %v525, 4294901760
        %527 = vmatmul.mubr.f32.gmra.mrb[0].mxu0 %v526
        %v528 = vpop.f32.mrb[0].mxu0
        %v529 = vadd.f32 %v449, %v528
        %v530 = vpop.f32.mrb[0].mxu0
        %531 = vmatprep.mubr.f32.mxu0 0.0
        %v532 = vand.u32 %v217, 4294901760
        %v533 = vsub.f32 %v217, %v532
        %v534 = vand.u32 %v533, 4294901760
        %535 = vmatmul.mubr.f32.gmra.mrb[0].mxu0 %v534
        %v536 = vpop.f32.mrb[0].mxu0
        %v537 = vadd.f32 %v456, %v536
        %v538 = vpop.f32.mrb[0].mxu0
        %539 = vdwg.mxu0
        %540 = vmatprep.subr.mxu0 0.0
        %541 = vmatpush1.msra.mxu0 0.0
        %542 = vmatprep.subr.mxu0 0.0
        %543 = vmatpush1.msra.mxu0 0.0
        %544 = vmatprep.subr.mxu0 0.0
        %545 = vmatpush1.msra.mxu0 0.0
        %546 = vmatprep.subr.mxu0 0.0
        %547 = vmatpush1.msra.mxu0 0.0
        %548 = vmatprep.subr.mxu0 0.0
        %549 = vmatpush1.msra.mxu0 0.0
        %550 = vmatprep.subr.mxu0 0.0
        %551 = vmatpush1.msra.mxu0 0.0
        %552 = vmatprep.subr.mxu0 0.0
        %553 = vmatpush1.msra.mxu0 0.0
        %554 = vmatprep.subr.mxu0 0.0
        %555 = vmatpush1.msra.mxu0 0.0
        %556 = vmatprep.subr.mxu0 0.0
        %557 = vmatpush1.msra.mxu0 0.0
        %558 = vmatprep.subr.mxu0 0.0
        %559 = vmatpush1.msra.mxu0 0.0
        %560 = vmatprep.subr.mxu0 0.0
        %561 = vmatpush1.msra.mxu0 0.0
        %562 = vmatprep.subr.mxu0 0.0
        %563 = vmatpush1.msra.mxu0 0.0
        %564 = vmatprep.subr.mxu0 0.0
        %565 = vmatpush1.msra.mxu0 0.0
        %566 = vmatprep.subr.mxu0 0.0
        %567 = vmatpush1.msra.mxu0 0.0
        %568 = vmatprep.subr.mxu0 0.0
        %569 = vmatpush1.msra.mxu0 0.0
        %570 = vmatprep.subr.mxu0 0.0
        %571 = vmatpush1.msra.mxu0 0.0
        %572 = vmatprep.subr.mxu0 0.0
        %573 = vmatpush1.msra.mxu0 0.0
        %574 = vmatprep.subr.mxu0 0.0
        %575 = vmatpush1.msra.mxu0 0.0
        %576 = vmatprep.subr.mxu0 0.0
        %577 = vmatpush1.msra.mxu0 0.0
        %578 = vmatprep.subr.mxu0 0.0
        %579 = vmatpush1.msra.mxu0 0.0
        %580 = vmatprep.subr.mxu0 0.0
        %581 = vmatpush1.msra.mxu0 0.0
        %582 = vmatprep.subr.mxu0 0.0
        %583 = vmatpush1.msra.mxu0 0.0
        %584 = vmatprep.subr.mxu0 0.0
        %585 = vmatpush1.msra.mxu0 0.0
        %586 = vmatprep.subr.mxu0 0.0
        %587 = vmatpush1.msra.mxu0 0.0
        %588 = vmatprep.subr.mxu0 0.0
        %589 = vmatpush1.msra.mxu0 0.0
        %590 = vmatprep.subr.mxu0 0.0
        %591 = vmatpush1.msra.mxu0 0.0
        %592 = vmatprep.subr.mxu0 0.0
        %593 = vmatpush1.msra.mxu0 0.0
        %594 = vmatprep.subr.mxu0 0.0
        %595 = vmatpush1.msra.mxu0 0.0
        %596 = vmatprep.subr.mxu0 0.0
        %597 = vmatpush1.msra.mxu0 0.0
        %598 = vmatprep.subr.mxu0 0.0
        %599 = vmatpush1.msra.mxu0 0.0
        %600 = vmatprep.subr.mxu0 0.0
        %601 = vmatpush1.msra.mxu0 0.0
        %602 = vmatprep.subr.mxu0 0.0
        %603 = vmatpush1.msra.mxu0 0.0
        %604 = vmatprep.mubr.f32.mxu0 0.0
        %v605 = vand.u32 %v215, 4294901760
        %606 = vmatmul.mubr.f32.gmra.mrb[0].mxu0 %v605
        %v607 = vpop.f32.mrb[0].mxu0
        %v608 = vadd.f32 %v529, %v607
        %v609 = vpop.f32.mrb[0].mxu0
        %610 = vmatprep.mubr.f32.mxu0 0.0
        %v611 = vand.u32 %v217, 4294901760
        %612 = vmatmul.mubr.f32.gmra.mrb[0].mxu0 %v611
        %v613 = vpop.f32.mrb[0].mxu0
        %v614 = vadd.f32 %v537, %v613
        %v615 = vpop.f32.mrb[0].mxu0
        %616 = vdwg.mxu0
        %617 = vmatprep.subr.mxu0 0.0
        %618 = vmatpush1.msra.mxu0 1.0
        %619 = vmatprep.subr.mxu0 0.0
        %620 = vmatpush1.msra.mxu0 1.0
        %621 = vmatprep.subr.mxu0 0.0
        %622 = vmatpush1.msra.mxu0 1.0
        %623 = vmatprep.subr.mxu0 0.0
        %624 = vmatpush1.msra.mxu0 1.0
        %625 = vmatprep.subr.mxu0 0.0
        %626 = vmatpush1.msra.mxu0 1.0
        %627 = vmatprep.subr.mxu0 0.0
        %628 = vmatpush1.msra.mxu0 1.0
        %629 = vmatprep.subr.mxu0 0.0
        %630 = vmatpush1.msra.mxu0 1.0
        %631 = vmatprep.subr.mxu0 0.0
        %632 = vmatpush1.msra.mxu0 1.0
        %633 = vmatprep.subr.mxu0 0.0
        %634 = vmatpush1.msra.mxu0 1.0
        %635 = vmatprep.subr.mxu0 0.0
        %636 = vmatpush1.msra.mxu0 1.0
        %637 = vmatprep.subr.mxu0 0.0
        %638 = vmatpush1.msra.mxu0 1.0
        %639 = vmatprep.subr.mxu0 0.0
        %640 = vmatpush1.msra.mxu0 1.0
        %641 = vmatprep.subr.mxu0 0.0
        %642 = vmatpush1.msra.mxu0 1.0
        %643 = vmatprep.subr.mxu0 0.0
        %644 = vmatpush1.msra.mxu0 1.0
        %645 = vmatprep.subr.mxu0 0.0
        %646 = vmatpush1.msra.mxu0 1.0
        %647 = vmatprep.subr.mxu0 0.0
        %648 = vmatpush1.msra.mxu0 1.0
        %649 = vmatprep.subr.mxu0 0.0
        %650 = vmatpush1.msra.mxu0 0.0
        %651 = vmatprep.subr.mxu0 0.0
        %652 = vmatpush1.msra.mxu0 0.0
        %653 = vmatprep.subr.mxu0 0.0
        %654 = vmatpush1.msra.mxu0 0.0
        %655 = vmatprep.subr.mxu0 0.0
        %656 = vmatpush1.msra.mxu0 0.0
        %657 = vmatprep.subr.mxu0 0.0
        %658 = vmatpush1.msra.mxu0 0.0
        %659 = vmatprep.subr.mxu0 0.0
        %660 = vmatpush1.msra.mxu0 0.0
        %661 = vmatprep.subr.mxu0 0.0
        %662 = vmatpush1.msra.mxu0 0.0
        %663 = vmatprep.subr.mxu0 0.0
        %664 = vmatpush1.msra.mxu0 0.0
        %665 = vmatprep.subr.mxu0 0.0
        %666 = vmatpush1.msra.mxu0 0.0
        %667 = vmatprep.subr.mxu0 0.0
        %668 = vmatpush1.msra.mxu0 0.0
        %669 = vmatprep.subr.mxu0 0.0
        %670 = vmatpush1.msra.mxu0 0.0
        %671 = vmatprep.subr.mxu0 0.0
        %672 = vmatpush1.msra.mxu0 0.0
        %673 = vmatprep.subr.mxu0 0.0
        %674 = vmatpush1.msra.mxu0 0.0
        %675 = vmatprep.subr.mxu0 0.0
        %676 = vmatpush1.msra.mxu0 0.0
        %677 = vmatprep.subr.mxu0 0.0
        %678 = vmatpush1.msra.mxu0 0.0
        %679 = vmatprep.subr.mxu0 0.0
        %680 = vmatpush1.msra.mxu0 0.0
        %681 = vmatprep.mubr.f32.mxu0 0.0
        %v682 = vand.u32 %v215, 4294901760
        %683 = vmatmul.mubr.f32.gmra.mrb[0].mxu0 %v682
        %v684 = vpop.f32.mrb[0].mxu0
        %v685 = vadd.f32 %v608, %v684
        %v686 = vpop.f32.mrb[0].mxu0
        %687 = vmatprep.mubr.f32.mxu0 0.0
        %v688 = vand.u32 %v217, 4294901760
        %689 = vmatmul.mubr.f32.gmra.mrb[0].mxu0 %v688
        %v690 = vpop.f32.mrb[0].mxu0
        %v691 = vadd.f32 %v614, %v690
        %v692 = vpop.f32.mrb[0].mxu0
        %693 = vdwg.mxu0
        %694 = vset.pattern.permute.xlu0 0
        %695 = vperm.xlu0 %694, %v206
        %v696 = vpop.permute.xlu0 %695
        %697 = vset.pattern.permute.xlu0 0
        %698 = vperm.xlu0 %697, %v207
        %v699 = vpop.permute.xlu0 %698
        %vm700 = vcmp.eq.s32.totalorder %v195, %v696
        %vm701 = vcmp.eq.s32.totalorder %v195, %v699
        %v702 = vsel %vm700, %v204, 0.0
        %v703 = vsel %vm701, %v205, 0.0
        %704 = vmatprep.subr.mxu0 0.0
        %705 = vmatpush1.msra.mxu0 1.0
        %706 = vmatprep.subr.mxu0 0.0
        %707 = vmatpush1.msra.mxu0 1.0
        %708 = vmatprep.subr.mxu0 0.0
        %709 = vmatpush1.msra.mxu0 1.0
        %710 = vmatprep.subr.mxu0 0.0
        %711 = vmatpush1.msra.mxu0 1.0
        %712 = vmatprep.subr.mxu0 0.0
        %713 = vmatpush1.msra.mxu0 1.0
        %714 = vmatprep.subr.mxu0 0.0
        %715 = vmatpush1.msra.mxu0 1.0
        %716 = vmatprep.subr.mxu0 0.0
        %717 = vmatpush1.msra.mxu0 1.0
        %718 = vmatprep.subr.mxu0 0.0
        %719 = vmatpush1.msra.mxu0 1.0
        %720 = vmatprep.subr.mxu0 0.0
        %721 = vmatpush1.msra.mxu0 1.0
        %722 = vmatprep.subr.mxu0 0.0
        %723 = vmatpush1.msra.mxu0 1.0
        %724 = vmatprep.subr.mxu0 0.0
        %725 = vmatpush1.msra.mxu0 1.0
        %726 = vmatprep.subr.mxu0 0.0
        %727 = vmatpush1.msra.mxu0 1.0
        %728 = vmatprep.subr.mxu0 0.0
        %729 = vmatpush1.msra.mxu0 1.0
        %730 = vmatprep.subr.mxu0 0.0
        %731 = vmatpush1.msra.mxu0 1.0
        %732 = vmatprep.subr.mxu0 0.0
        %733 = vmatpush1.msra.mxu0 1.0
        %734 = vmatprep.subr.mxu0 0.0
        %735 = vmatpush1.msra.mxu0 1.0
        %736 = vmatprep.subr.mxu0 0.0
        %737 = vmatpush1.msra.mxu0 0.0
        %738 = vmatprep.subr.mxu0 0.0
        %739 = vmatpush1.msra.mxu0 0.0
        %740 = vmatprep.subr.mxu0 0.0
        %741 = vmatpush1.msra.mxu0 0.0
        %742 = vmatprep.subr.mxu0 0.0
        %743 = vmatpush1.msra.mxu0 0.0
        %744 = vmatprep.subr.mxu0 0.0
        %745 = vmatpush1.msra.mxu0 0.0
        %746 = vmatprep.subr.mxu0 0.0
        %747 = vmatpush1.msra.mxu0 0.0
        %748 = vmatprep.subr.mxu0 0.0
        %749 = vmatpush1.msra.mxu0 0.0
        %750 = vmatprep.subr.mxu0 0.0
        %751 = vmatpush1.msra.mxu0 0.0
        %752 = vmatprep.subr.mxu0 0.0
        %753 = vmatpush1.msra.mxu0 0.0
        %754 = vmatprep.subr.mxu0 0.0
        %755 = vmatpush1.msra.mxu0 0.0
        %756 = vmatprep.subr.mxu0 0.0
        %757 = vmatpush1.msra.mxu0 0.0
        %758 = vmatprep.subr.mxu0 0.0
        %759 = vmatpush1.msra.mxu0 0.0
        %760 = vmatprep.subr.mxu0 0.0
        %761 = vmatpush1.msra.mxu0 0.0
        %762 = vmatprep.subr.mxu0 0.0
        %763 = vmatpush1.msra.mxu0 0.0
        %764 = vmatprep.subr.mxu0 0.0
        %765 = vmatpush1.msra.mxu0 0.0
        %766 = vmatprep.subr.mxu0 0.0
        %767 = vmatpush1.msra.mxu0 0.0
        %768 = vmatprep.mubr.f32.mxu0 0.0
        %v769 = vand.u32 %v702, 4294901760
        %v770 = vsub.f32 %v702, %v769
        %v771 = vand.u32 %v770, 4294901760
        %v772 = vsub.f32 %v770, %v771
        %v773 = vand.u32 %v772, 4294901760
        %774 = vmatmul.mubr.f32.gmra.mrb[0].mxu0 %v773
        %v775 = vpop.f32.mrb[0].mxu0
        %v776 = vadd.f32 0.0, %v775
        %v777 = vpop.f32.mrb[0].mxu0
        %778 = vmatprep.mubr.f32.mxu0 0.0
        %v779 = vand.u32 %v703, 4294901760
        %v780 = vsub.f32 %v703, %v779
        %v781 = vand.u32 %v780, 4294901760
        %v782 = vsub.f32 %v780, %v781
        %v783 = vand.u32 %v782, 4294901760
        %784 = vmatmul.mubr.f32.gmra.mrb[0].mxu0 %v783
        %v785 = vpop.f32.mrb[0].mxu0
        %v786 = vadd.f32 0.0, %v785
        %v787 = vpop.f32.mrb[0].mxu0
        %788 = vdwg.mxu0
        %789 = vmatprep.subr.mxu0 0.0
        %790 = vmatpush1.msra.mxu0 0.0
        %791 = vmatprep.subr.mxu0 0.0
        %792 = vmatpush1.msra.mxu0 0.0
        %793 = vmatprep.subr.mxu0 0.0
        %794 = vmatpush1.msra.mxu0 0.0
        %795 = vmatprep.subr.mxu0 0.0
        %796 = vmatpush1.msra.mxu0 0.0
        %797 = vmatprep.subr.mxu0 0.0
        %798 = vmatpush1.msra.mxu0 0.0
        %799 = vmatprep.subr.mxu0 0.0
        %800 = vmatpush1.msra.mxu0 0.0
        %801 = vmatprep.subr.mxu0 0.0
        %802 = vmatpush1.msra.mxu0 0.0
        %803 = vmatprep.subr.mxu0 0.0
        %804 = vmatpush1.msra.mxu0 0.0
        %805 = vmatprep.subr.mxu0 0.0
        %806 = vmatpush1.msra.mxu0 0.0
        %807 = vmatprep.subr.mxu0 0.0
        %808 = vmatpush1.msra.mxu0 0.0
        %809 = vmatprep.subr.mxu0 0.0
        %810 = vmatpush1.msra.mxu0 0.0
        %811 = vmatprep.subr.mxu0 0.0
        %812 = vmatpush1.msra.mxu0 0.0
        %813 = vmatprep.subr.mxu0 0.0
        %814 = vmatpush1.msra.mxu0 0.0
        %815 = vmatprep.subr.mxu0 0.0
        %816 = vmatpush1.msra.mxu0 0.0
        %817 = vmatprep.subr.mxu0 0.0
        %818 = vmatpush1.msra.mxu0 0.0
        %819 = vmatprep.subr.mxu0 0.0
        %820 = vmatpush1.msra.mxu0 0.0
        %821 = vmatprep.subr.mxu0 0.0
        %822 = vmatpush1.msra.mxu0 0.0
        %823 = vmatprep.subr.mxu0 0.0
        %824 = vmatpush1.msra.mxu0 0.0
        %825 = vmatprep.subr.mxu0 0.0
        %826 = vmatpush1.msra.mxu0 0.0
        %827 = vmatprep.subr.mxu0 0.0
        %828 = vmatpush1.msra.mxu0 0.0
        %829 = vmatprep.subr.mxu0 0.0
        %830 = vmatpush1.msra.mxu0 0.0
        %831 = vmatprep.subr.mxu0 0.0
        %832 = vmatpush1.msra.mxu0 0.0
        %833 = vmatprep.subr.mxu0 0.0
        %834 = vmatpush1.msra.mxu0 0.0
        %835 = vmatprep.subr.mxu0 0.0
        %836 = vmatpush1.msra.mxu0 0.0
        %837 = vmatprep.subr.mxu0 0.0
        %838 = vmatpush1.msra.mxu0 0.0
        %839 = vmatprep.subr.mxu0 0.0
        %840 = vmatpush1.msra.mxu0 0.0
        %841 = vmatprep.subr.mxu0 0.0
        %842 = vmatpush1.msra.mxu0 0.0
        %843 = vmatprep.subr.mxu0 0.0
        %844 = vmatpush1.msra.mxu0 0.0
        %845 = vmatprep.subr.mxu0 0.0
        %846 = vmatpush1.msra.mxu0 0.0
        %847 = vmatprep.subr.mxu0 0.0
        %848 = vmatpush1.msra.mxu0 0.0
        %849 = vmatprep.subr.mxu0 0.0
        %850 = vmatpush1.msra.mxu0 0.0
        %851 = vmatprep.subr.mxu0 0.0
        %852 = vmatpush1.msra.mxu0 0.0
        %853 = vmatprep.mubr.f32.mxu0 0.0
        %v854 = vand.u32 %v702, 4294901760
        %855 = vmatmul.mubr.f32.gmra.mrb[0].mxu0 %v854
        %v856 = vpop.f32.mrb[0].mxu0
        %v857 = vadd.f32 %v776, %v856
        %v858 = vpop.f32.mrb[0].mxu0
        %859 = vmatprep.mubr.f32.mxu0 0.0
        %v860 = vand.u32 %v703, 4294901760
        %861 = vmatmul.mubr.f32.gmra.mrb[0].mxu0 %v860
        %v862 = vpop.f32.mrb[0].mxu0
        %v863 = vadd.f32 %v786, %v862
        %v864 = vpop.f32.mrb[0].mxu0
        %865 = vdwg.mxu0
        %866 = vmatprep.subr.mxu0 0.0
        %867 = vmatpush1.msra.mxu0 0.0
        %868 = vmatprep.subr.mxu0 0.0
        %869 = vmatpush1.msra.mxu0 0.0
        %870 = vmatprep.subr.mxu0 0.0
        %871 = vmatpush1.msra.mxu0 0.0
        %872 = vmatprep.subr.mxu0 0.0
        %873 = vmatpush1.msra.mxu0 0.0
        %874 = vmatprep.subr.mxu0 0.0
        %875 = vmatpush1.msra.mxu0 0.0
        %876 = vmatprep.subr.mxu0 0.0
        %877 = vmatpush1.msra.mxu0 0.0
        %878 = vmatprep.subr.mxu0 0.0
        %879 = vmatpush1.msra.mxu0 0.0
        %880 = vmatprep.subr.mxu0 0.0
        %881 = vmatpush1.msra.mxu0 0.0
        %882 = vmatprep.subr.mxu0 0.0
        %883 = vmatpush1.msra.mxu0 0.0
        %884 = vmatprep.subr.mxu0 0.0
        %885 = vmatpush1.msra.mxu0 0.0
        %886 = vmatprep.subr.mxu0 0.0
        %887 = vmatpush1.msra.mxu0 0.0
        %888 = vmatprep.subr.mxu0 0.0
        %889 = vmatpush1.msra.mxu0 0.0
        %890 = vmatprep.subr.mxu0 0.0
        %891 = vmatpush1.msra.mxu0 0.0
        %892 = vmatprep.subr.mxu0 0.0
        %893 = vmatpush1.msra.mxu0 0.0
        %894 = vmatprep.subr.mxu0 0.0
        %895 = vmatpush1.msra.mxu0 0.0
        %896 = vmatprep.subr.mxu0 0.0
        %897 = vmatpush1.msra.mxu0 0.0
        %898 = vmatprep.subr.mxu0 0.0
        %899 = vmatpush1.msra.mxu0 0.0
        %900 = vmatprep.subr.mxu0 0.0
        %901 = vmatpush1.msra.mxu0 0.0
        %902 = vmatprep.subr.mxu0 0.0
        %903 = vmatpush1.msra.mxu0 0.0
        %904 = vmatprep.subr.mxu0 0.0
        %905 = vmatpush1.msra.mxu0 0.0
        %906 = vmatprep.subr.mxu0 0.0
        %907 = vmatpush1.msra.mxu0 0.0
        %908 = vmatprep.subr.mxu0 0.0
        %909 = vmatpush1.msra.mxu0 0.0
        %910 = vmatprep.subr.mxu0 0.0
        %911 = vmatpush1.msra.mxu0 0.0
        %912 = vmatprep.subr.mxu0 0.0
        %913 = vmatpush1.msra.mxu0 0.0
        %914 = vmatprep.subr.mxu0 0.0
        %915 = vmatpush1.msra.mxu0 0.0
        %916 = vmatprep.subr.mxu0 0.0
        %917 = vmatpush1.msra.mxu0 0.0
        %918 = vmatprep.subr.mxu0 0.0
        %919 = vmatpush1.msra.mxu0 0.0
        %920 = vmatprep.subr.mxu0 0.0
        %921 = vmatpush1.msra.mxu0 0.0
        %922 = vmatprep.subr.mxu0 0.0
        %923 = vmatpush1.msra.mxu0 0.0
        %924 = vmatprep.subr.mxu0 0.0
        %925 = vmatpush1.msra.mxu0 0.0
        %926 = vmatprep.subr.mxu0 0.0
        %927 = vmatpush1.msra.mxu0 0.0
        %928 = vmatprep.subr.mxu0 0.0
        %929 = vmatpush1.msra.mxu0 0.0
        %930 = vmatprep.mubr.f32.mxu0 0.0
        %v931 = vand.u32 %v702, 4294901760
        %v932 = vsub.f32 %v702, %v931
        %933 = vmatmul.mubr.f32.gmra.mrb[0].mxu0 %v932
        %v934 = vpop.f32.mrb[0].mxu0
        %v935 = vadd.f32 %v857, %v934
        %v936 = vpop.f32.mrb[0].mxu0
        %937 = vmatprep.mubr.f32.mxu0 0.0
        %v938 = vand.u32 %v703, 4294901760
        %v939 = vsub.f32 %v703, %v938
        %940 = vmatmul.mubr.f32.gmra.mrb[0].mxu0 %v939
        %v941 = vpop.f32.mrb[0].mxu0
        %v942 = vadd.f32 %v863, %v941
        %v943 = vpop.f32.mrb[0].mxu0
        %944 = vdwg.mxu0
        %945 = vmatprep.subr.mxu0 0.0
        %946 = vmatpush1.msra.mxu0 1.0
        %947 = vmatprep.subr.mxu0 0.0
        %948 = vmatpush1.msra.mxu0 1.0
        %949 = vmatprep.subr.mxu0 0.0
        %950 = vmatpush1.msra.mxu0 1.0
        %951 = vmatprep.subr.mxu0 0.0
        %952 = vmatpush1.msra.mxu0 1.0
        %953 = vmatprep.subr.mxu0 0.0
        %954 = vmatpush1.msra.mxu0 1.0
        %955 = vmatprep.subr.mxu0 0.0
        %956 = vmatpush1.msra.mxu0 1.0
        %957 = vmatprep.subr.mxu0 0.0
        %958 = vmatpush1.msra.mxu0 1.0
        %959 = vmatprep.subr.mxu0 0.0
        %960 = vmatpush1.msra.mxu0 1.0
        %961 = vmatprep.subr.mxu0 0.0
        %962 = vmatpush1.msra.mxu0 1.0
        %963 = vmatprep.subr.mxu0 0.0
        %964 = vmatpush1.msra.mxu0 1.0
        %965 = vmatprep.subr.mxu0 0.0
        %966 = vmatpush1.msra.mxu0 1.0
        %967 = vmatprep.subr.mxu0 0.0
        %968 = vmatpush1.msra.mxu0 1.0
        %969 = vmatprep.subr.mxu0 0.0
        %970 = vmatpush1.msra.mxu0 1.0
        %971 = vmatprep.subr.mxu0 0.0
        %972 = vmatpush1.msra.mxu0 1.0
        %973 = vmatprep.subr.mxu0 0.0
        %974 = vmatpush1.msra.mxu0 1.0
        %975 = vmatprep.subr.mxu0 0.0
        %976 = vmatpush1.msra.mxu0 1.0
        %977 = vmatprep.subr.mxu0 0.0
        %978 = vmatpush1.msra.mxu0 0.0
        %979 = vmatprep.subr.mxu0 0.0
        %980 = vmatpush1.msra.mxu0 0.0
        %981 = vmatprep.subr.mxu0 0.0
        %982 = vmatpush1.msra.mxu0 0.0
        %983 = vmatprep.subr.mxu0 0.0
        %984 = vmatpush1.msra.mxu0 0.0
        %985 = vmatprep.subr.mxu0 0.0
        %986 = vmatpush1.msra.mxu0 0.0
        %987 = vmatprep.subr.mxu0 0.0
        %988 = vmatpush1.msra.mxu0 0.0
        %989 = vmatprep.subr.mxu0 0.0
        %990 = vmatpush1.msra.mxu0 0.0
        %991 = vmatprep.subr.mxu0 0.0
        %992 = vmatpush1.msra.mxu0 0.0
        %993 = vmatprep.subr.mxu0 0.0
        %994 = vmatpush1.msra.mxu0 0.0
        %995 = vmatprep.subr.mxu0 0.0
        %996 = vmatpush1.msra.mxu0 0.0
        %997 = vmatprep.subr.mxu0 0.0
        %998 = vmatpush1.msra.mxu0 0.0
        %999 = vmatprep.subr.mxu0 0.0
        %1000 = vmatpush1.msra.mxu0 0.0
        %1001 = vmatprep.subr.mxu0 0.0
        %1002 = vmatpush1.msra.mxu0 0.0
        %1003 = vmatprep.subr.mxu0 0.0
        %1004 = vmatpush1.msra.mxu0 0.0
        %1005 = vmatprep.subr.mxu0 0.0
        %1006 = vmatpush1.msra.mxu0 0.0
        %1007 = vmatprep.subr.mxu0 0.0
        %1008 = vmatpush1.msra.mxu0 0.0
        %1009 = vmatprep.mubr.f32.mxu0 0.0
        %v1010 = vand.u32 %v702, 4294901760
        %v1011 = vsub.f32 %v702, %v1010
        %v1012 = vand.u32 %v1011, 4294901760
        %1013 = vmatmul.mubr.f32.gmra.mrb[0].mxu0 %v1012
        %v1014 = vpop.f32.mrb[0].mxu0
        %v1015 = vadd.f32 %v935, %v1014
        %v1016 = vpop.f32.mrb[0].mxu0
        %1017 = vmatprep.mubr.f32.mxu0 0.0
        %v1018 = vand.u32 %v703, 4294901760
        %v1019 = vsub.f32 %v703, %v1018
        %v1020 = vand.u32 %v1019, 4294901760
        %1021 = vmatmul.mubr.f32.gmra.mrb[0].mxu0 %v1020
        %v1022 = vpop.f32.mrb[0].mxu0
        %v1023 = vadd.f32 %v942, %v1022
        %v1024 = vpop.f32.mrb[0].mxu0
        %1025 = vdwg.mxu0
        %1026 = vmatprep.subr.mxu0 0.0
        %1027 = vmatpush1.msra.mxu0 0.0
        %1028 = vmatprep.subr.mxu0 0.0
        %1029 = vmatpush1.msra.mxu0 0.0
        %1030 = vmatprep.subr.mxu0 0.0
        %1031 = vmatpush1.msra.mxu0 0.0
        %1032 = vmatprep.subr.mxu0 0.0
        %1033 = vmatpush1.msra.mxu0 0.0
        %1034 = vmatprep.subr.mxu0 0.0
        %1035 = vmatpush1.msra.mxu0 0.0
        %1036 = vmatprep.subr.mxu0 0.0
        %1037 = vmatpush1.msra.mxu0 0.0
        %1038 = vmatprep.subr.mxu0 0.0
        %1039 = vmatpush1.msra.mxu0 0.0
        %1040 = vmatprep.subr.mxu0 0.0
        %1041 = vmatpush1.msra.mxu0 0.0
        %1042 = vmatprep.subr.mxu0 0.0
        %1043 = vmatpush1.msra.mxu0 0.0
        %1044 = vmatprep.subr.mxu0 0.0
        %1045 = vmatpush1.msra.mxu0 0.0
        %1046 = vmatprep.subr.mxu0 0.0
        %1047 = vmatpush1.msra.mxu0 0.0
        %1048 = vmatprep.subr.mxu0 0.0
        %1049 = vmatpush1.msra.mxu0 0.0
        %1050 = vmatprep.subr.mxu0 0.0
        %1051 = vmatpush1.msra.mxu0 0.0
        %1052 = vmatprep.subr.mxu0 0.0
        %1053 = vmatpush1.msra.mxu0 0.0
        %1054 = vmatprep.subr.mxu0 0.0
        %1055 = vmatpush1.msra.mxu0 0.0
        %1056 = vmatprep.subr.mxu0 0.0
        %1057 = vmatpush1.msra.mxu0 0.0
        %1058 = vmatprep.subr.mxu0 0.0
        %1059 = vmatpush1.msra.mxu0 0.0
        %1060 = vmatprep.subr.mxu0 0.0
        %1061 = vmatpush1.msra.mxu0 0.0
        %1062 = vmatprep.subr.mxu0 0.0
        %1063 = vmatpush1.msra.mxu0 0.0
        %1064 = vmatprep.subr.mxu0 0.0
        %1065 = vmatpush1.msra.mxu0 0.0
        %1066 = vmatprep.subr.mxu0 0.0
        %1067 = vmatpush1.msra.mxu0 0.0
        %1068 = vmatprep.subr.mxu0 0.0
        %1069 = vmatpush1.msra.mxu0 0.0
        %1070 = vmatprep.subr.mxu0 0.0
        %1071 = vmatpush1.msra.mxu0 0.0
        %1072 = vmatprep.subr.mxu0 0.0
        %1073 = vmatpush1.msra.mxu0 0.0
        %1074 = vmatprep.subr.mxu0 0.0
        %1075 = vmatpush1.msra.mxu0 0.0
        %1076 = vmatprep.subr.mxu0 0.0
        %1077 = vmatpush1.msra.mxu0 0.0
        %1078 = vmatprep.subr.mxu0 0.0
        %1079 = vmatpush1.msra.mxu0 0.0
        %1080 = vmatprep.subr.mxu0 0.0
        %1081 = vmatpush1.msra.mxu0 0.0
        %1082 = vmatprep.subr.mxu0 0.0
        %1083 = vmatpush1.msra.mxu0 0.0
        %1084 = vmatprep.subr.mxu0 0.0
        %1085 = vmatpush1.msra.mxu0 0.0
        %1086 = vmatprep.subr.mxu0 0.0
        %1087 = vmatpush1.msra.mxu0 0.0
        %1088 = vmatprep.subr.mxu0 0.0
        %1089 = vmatpush1.msra.mxu0 0.0
        %1090 = vmatprep.mubr.f32.mxu0 0.0
        %v1091 = vand.u32 %v702, 4294901760
        %1092 = vmatmul.mubr.f32.gmra.mrb[0].mxu0 %v1091
        %v1093 = vpop.f32.mrb[0].mxu0
        %v1094 = vadd.f32 %v1015, %v1093
        %v1095 = vpop.f32.mrb[0].mxu0
        %1096 = vmatprep.mubr.f32.mxu0 0.0
        %v1097 = vand.u32 %v703, 4294901760
        %1098 = vmatmul.mubr.f32.gmra.mrb[0].mxu0 %v1097
        %v1099 = vpop.f32.mrb[0].mxu0
        %v1100 = vadd.f32 %v1023, %v1099
        %v1101 = vpop.f32.mrb[0].mxu0
        %1102 = vdwg.mxu0
        %1103 = vmatprep.subr.mxu0 0.0
        %1104 = vmatpush1.msra.mxu0 1.0
        %1105 = vmatprep.subr.mxu0 0.0
        %1106 = vmatpush1.msra.mxu0 1.0
        %1107 = vmatprep.subr.mxu0 0.0
        %1108 = vmatpush1.msra.mxu0 1.0
        %1109 = vmatprep.subr.mxu0 0.0
        %1110 = vmatpush1.msra.mxu0 1.0
        %1111 = vmatprep.subr.mxu0 0.0
        %1112 = vmatpush1.msra.mxu0 1.0
        %1113 = vmatprep.subr.mxu0 0.0
        %1114 = vmatpush1.msra.mxu0 1.0
        %1115 = vmatprep.subr.mxu0 0.0
        %1116 = vmatpush1.msra.mxu0 1.0
        %1117 = vmatprep.subr.mxu0 0.0
        %1118 = vmatpush1.msra.mxu0 1.0
        %1119 = vmatprep.subr.mxu0 0.0
        %1120 = vmatpush1.msra.mxu0 1.0
        %1121 = vmatprep.subr.mxu0 0.0
        %1122 = vmatpush1.msra.mxu0 1.0
        %1123 = vmatprep.subr.mxu0 0.0
        %1124 = vmatpush1.msra.mxu0 1.0
        %1125 = vmatprep.subr.mxu0 0.0
        %1126 = vmatpush1.msra.mxu0 1.0
        %1127 = vmatprep.subr.mxu0 0.0
        %1128 = vmatpush1.msra.mxu0 1.0
        %1129 = vmatprep.subr.mxu0 0.0
        %1130 = vmatpush1.msra.mxu0 1.0
        %1131 = vmatprep.subr.mxu0 0.0
        %1132 = vmatpush1.msra.mxu0 1.0
        %1133 = vmatprep.subr.mxu0 0.0
        %1134 = vmatpush1.msra.mxu0 1.0
        %1135 = vmatprep.subr.mxu0 0.0
        %1136 = vmatpush1.msra.mxu0 0.0
        %1137 = vmatprep.subr.mxu0 0.0
        %1138 = vmatpush1.msra.mxu0 0.0
        %1139 = vmatprep.subr.mxu0 0.0
        %1140 = vmatpush1.msra.mxu0 0.0
        %1141 = vmatprep.subr.mxu0 0.0
        %1142 = vmatpush1.msra.mxu0 0.0
        %1143 = vmatprep.subr.mxu0 0.0
        %1144 = vmatpush1.msra.mxu0 0.0
        %1145 = vmatprep.subr.mxu0 0.0
        %1146 = vmatpush1.msra.mxu0 0.0
        %1147 = vmatprep.subr.mxu0 0.0
        %1148 = vmatpush1.msra.mxu0 0.0
        %1149 = vmatprep.subr.mxu0 0.0
        %1150 = vmatpush1.msra.mxu0 0.0
        %1151 = vmatprep.subr.mxu0 0.0
        %1152 = vmatpush1.msra.mxu0 0.0
        %1153 = vmatprep.subr.mxu0 0.0
        %1154 = vmatpush1.msra.mxu0 0.0
        %1155 = vmatprep.subr.mxu0 0.0
        %1156 = vmatpush1.msra.mxu0 0.0
        %1157 = vmatprep.subr.mxu0 0.0
        %1158 = vmatpush1.msra.mxu0 0.0
        %1159 = vmatprep.subr.mxu0 0.0
        %1160 = vmatpush1.msra.mxu0 0.0
        %1161 = vmatprep.subr.mxu0 0.0
        %1162 = vmatpush1.msra.mxu0 0.0
        %1163 = vmatprep.subr.mxu0 0.0
        %1164 = vmatpush1.msra.mxu0 0.0
        %1165 = vmatprep.subr.mxu0 0.0
        %1166 = vmatpush1.msra.mxu0 0.0
        %1167 = vmatprep.mubr.f32.mxu0 0.0
        %v1168 = vand.u32 %v702, 4294901760
        %1169 = vmatmul.mubr.f32.gmra.mrb[0].mxu0 %v1168
        %v1170 = vpop.f32.mrb[0].mxu0
        %v1171 = vadd.f32 %v1094, %v1170
        %v1172 = vpop.f32.mrb[0].mxu0
        %1173 = vmatprep.mubr.f32.mxu0 0.0
        %v1174 = vand.u32 %v703, 4294901760
        %1175 = vmatmul.mubr.f32.gmra.mrb[0].mxu0 %v1174
        %v1176 = vpop.f32.mrb[0].mxu0
        %v1177 = vadd.f32 %v1100, %v1176
        %v1178 = vpop.f32.mrb[0].mxu0
        %1179 = vdwg.mxu0
        %vm1180 = vcmp.ne.s32.totalorder %v206, 4294967196
        %vm1181 = vcmp.ne.s32.totalorder %v207, 4294967196
        %v1182 = vsel %vm1180, 1, 0
        %v1183 = vsel %vm1181, 1, 0
        %v1184 = vcvt.s32.f32 %v1182
        %v1185 = vcvt.s32.f32 %v1183
        %v1186 = vlog2.pop %v685
        %v1187 = vmul.f32 %v1186, 0.6931472
        %v1188 = vlog2.pop %v691
        %v1189 = vmul.f32 %v1188, 0.6931472
        %v1190 = vadd.f32 %v209, %v1187
        %v1191 = vadd.f32 %v211, %v1189
        %v1192 = vsub.f32 %v1190, %v1171
        %v1193 = vsub.f32 %v1191, %v1177
        %v1194 = vmul.f32 %v1192, %v1184
        %v1195 = vmul.f32 %v1193, %v1185
        %vm1196 = vcmask 7168
        %v1197 = vsel %vm1196, %v1194, 0.0
        %v1198 = vsel %vm1196, %v1195, 0.0
        %v1199 = vadd.f32 %v1197, %v1198
        %v1200 = vrot.slane %v1199, 4
        %v1201 = vadd.f32 %v1199, %v1200
        %v1202 = vrot.slane %v1201, 2
        %v1203 = vadd.f32 %v1201, %v1202
        %v1204 = vrot.slane %v1203, 1
        %v1205 = vadd.f32 %v1203, %v1204
        %v1206 = vadd.f32 %v1205, 0.0
        %1208 = vset.pattern.permute.xlu0 0
        %1209 = vperm.xlu0 %1208, %v1206
        %v1210 = vpop.permute.xlu0 %1209
        %1212 = vst [vmem:[%s180] sm:$0xff] %v1210
        %s1213 = sand.u32 %s98, 1
        %s1214 = scalar_lea.sflag [#allocation3], %s1213
        %s1215 = sand.u32 %s98, 1
        %s1216 = smul.addr %s1215, 8
        %s1217 = scalar_lea.vmem [#allocation2], %s1216
        // Predicated region
        $region33: #{tpu_custom_call.1} parent=31 // pred_check
          %p1218 = pneg %p108
        $region34: #{tpu_custom_call.1} parent=31 // pred_check_branch
          %1220 = sbr.rel (%p1218) target = $region36
        $region35: #{tpu_custom_call.1} parent=31 // pred_region
          %s1222 = ssub.s32 128, 128
          %1223 = vsyncadd %s1214, %s1222
          %s1224 = smul.addr %s17, 128
          %s1225 = scalar_lea.hbm %s3, %s1224
          %s1227 = sshll.u32 %s1217, 4
          %s1228 = int_to_ptr.vmem [resolvable:$true] %s1227
          %1230 = dma.vmem_to_hbm [thread:$0]  %s1228, 128, %s1225, %s1214
        $region36: #{tpu_custom_call.1} parent=31 // pred_fallthru
          _
      $region32: #{tpu_custom_call.1} parent=5 // pred_fallthru
        _
      %p1231 = scmp.le.s32.totalorder 2, %s12
      // Predicated region
      $region37: #{tpu_custom_call.1} parent=5 // pred_check
        %p1232 = pneg %p1231
      $region38: #{tpu_custom_call.1} parent=5 // pred_check_branch
        %1234 = sbr.rel (%p1232) target = $region40
      $region39: #{tpu_custom_call.1} parent=5 // pred_region
        %s1235 = ssub.s32 %s12, 2
        // Predicated region
        $region41: #{tpu_custom_call.1} parent=39 // pred_check
          %p1236 = pneg %p114
        $region42: #{tpu_custom_call.1} parent=39 // pred_check_branch
          %1238 = sbr.rel (%p1236) target = $region44
        $region43: #{tpu_custom_call.1} parent=39 // pred_region
          %s1239 = sand.u32 %s99, 1
          %s1240 = scalar_lea.sflag [#allocation3], %s1239
          %s1241 = sand.u32 %s99, 1
          %s1242 = smul.addr %s1241, 8
          %s1243 = scalar_lea.vmem [#allocation2], %s1242
          %1244 = dma.done %s1240, 128
        $region44: #{tpu_custom_call.1} parent=39 // pred_fallthru
          _
      $region40: #{tpu_custom_call.1} parent=5 // pred_fallthru
        _
    $region6: #{tpu_custom_call.1} parent=1 // loop_footer
      %s16 = sadd.s32 1, %s12
    $region7: #{tpu_custom_call.1} parent=1 // loop_footer_branch
      %11 = sbr.rel target = $region3
    $region8: #{tpu_custom_call.1} parent=1 // loop_exit
      _
    %1245 = vsyncpa [#allocation3], 1
    %s1246 = scalar_lea.sflag [#allocation3], 1
    %1247 = vsyncpa %s1246, 1

</llo_original>
